<compile_context>
chip_gen: v5e
topology: v5e:2x2
jax: 0.10.0
libtpu: 0.0.40
codegen_flags: <defaults>
</compile_context>

<pallas_src>
import jax
import jax.numpy as jnp
from jax import lax
from jax.experimental import pallas as pl
from jax.experimental.pallas import tpu as pltpu

LN_EPS = 1e-5  # nn.LayerNorm default


def _round_up(x, m):
    return (x + m - 1) // m * m


def _sublane(dtype):
    # Minimum second-to-last tile dim: f32 -> 8, bf16 -> 16, int8/fp8 -> 32.
    return max(8, 32 // jnp.dtype(dtype).itemsize)


def _pick_col_tile(d, preferred):
    """Lane-dense output-column tile (multiple of 128), preferring multiples of
    256 (the v6e/v7x MXU width).  D is padded up to a multiple of the tile."""
    cands = []
    if preferred >= 128 and preferred % 128 == 0:
        cands.append(preferred)
    cands += [512, 256, 128]
    best, best_cost = 128, None
    for c in cands:
        padded = _round_up(d, c)
        # Cost = padded work; mild penalty for half-MXU-width (128) tiles.
        cost = padded * (1.0 if c % 256 == 0 else 1.15)
        if best_cost is None or cost < best_cost:
            best, best_cost = c, cost
    return best


def _prenorm_kernel(x_ref, gamma_ref, beta_ref, w_ref, bias_ref, o_ref, y_ref):
    # x_ref:     (tm, D)    row tile, full hidden dim -> exact LN statistics
    # gamma_ref: (1, D)     LayerNorm weight, f32
    # beta_ref:  (1, D)     LayerNorm bias,   f32
    # w_ref:     (D, tn)    Linear weight column tile (matmul dtype)
    # bias_ref:  (1, tn)    Linear bias column tile, f32
    # o_ref:     (tm, tn)   output tile
    # y_ref:     (tm, D)    VMEM scratch: LayerNorm(x) for the current row tile
    j = pl.program_id(1)

    # LayerNorm once per row tile (first column step); reuse for all columns.
    @pl.when(j == 0)
    def _():
        xf = x_ref[...].astype(jnp.float32)
        inv_d = 1.0 / x_ref.shape[-1]
        mean = jnp.sum(xf, axis=-1, keepdims=True) * inv_d
        mean_sq = jnp.sum(xf * xf, axis=-1, keepdims=True) * inv_d
        var = jnp.maximum(mean_sq - mean * mean, 0.0)   # single-pass stats
        inv = lax.rsqrt(var + LN_EPS)
        y_ref[...] = (((xf - mean) * inv) * gamma_ref[...]
                      + beta_ref[...]).astype(y_ref.dtype)

    # fn = Linear: y @ W[:, j-tile] + b[j-tile], f32 accumulation on the MXU.
    out = jnp.dot(y_ref[...], w_ref[...], preferred_element_type=jnp.float32)
    o_ref[...] = (out + bias_ref[...]).astype(o_ref.dtype)


def prenorm(x, gamma, beta, w, b, *, block_rows=1024, block_cols=512,
            matmul_dtype=None):
    """PreNorm forward: fn(LayerNorm(x)), fn = Linear(dim, dim).

    x: (B, N, D);  gamma, beta: (D,);  w: (D, D) laid out (in, out);  b: (D,)
    matmul_dtype: optional dtype for the matmul operands (e.g. jnp.bfloat16
                  for an f32 model); accumulation is always f32.
    """
    B, N, D = x.shape
    rows = B * N
    x2 = x.reshape(rows, D)

    mm_dtype = jnp.dtype(matmul_dtype) if matmul_dtype is not None else jnp.dtype(x.dtype)
    sub = max(_sublane(x.dtype), _sublane(mm_dtype))

    # ---- row tile ----
    tm = block_rows if rows >= block_rows else _round_up(rows, sub)
    tm = _round_up(tm, sub)
    # Megacore: make sure the "parallel" row axis has >= 2 steps when possible
    # (v7x has 2 TensorCores; one extra grid step is ~free on v5e/v6e).
    if rows >= 2 * sub and _round_up(rows, tm) // tm < 2:
        tm = _round_up(pl.cdiv(rows, 2), sub)

    # ---- column tile (output dim of W); pad D to the tile ----
    tn = _pick_col_tile(D, block_cols)
    D_pad = _round_up(D, tn)

    # ---- VMEM budget from the actual device; auto-shrink tiles to fit ----
    try:
        vmem_cap = int(pltpu.get_tpu_info().vmem_capacity_bytes)
    except Exception:
        vmem_cap = 64 * 1024 * 1024          # conservative (v7x per-core VMEM)
    budget = (vmem_cap * 3) // 4

    x_item = jnp.dtype(x.dtype).itemsize
    y_item = jnp.dtype(mm_dtype).itemsize
    w_item = y_item                          # W is cast to the matmul dtype

    def footprint(tm_, tn_):
        # Conservative: x counted double-buffered even if Buffered(1) is used.
        return (2 * tm_ * D * x_item         # x row tile
                + tm_ * D * y_item           # LayerNorm(x) scratch
                + 2 * D * tn_ * w_item       # W column tile, double-buffered
                + 2 * tm_ * tn_ * x_item     # output tile, double-buffered
                + 4 * D * 4                  # gamma + beta (f32)
                + 2 * tn_ * 4)               # bias tile (f32)

    while footprint(tm, tn) > budget and tm > max(sub, 256):
        tm = max(_round_up(tm // 2, sub), sub)
    while footprint(tm, tn) > budget and tn > 128:
        tn = 256 if tn > 256 else 128
        D_pad = _round_up(D, tn)
    while footprint(tm, tn) > budget and tm > sub:
        tm = max(_round_up(tm // 2, sub), sub)

    vmem_limit = min(budget, max(int(footprint(tm, tn) * 1.5), 16 * 1024 * 1024))

    # ---- pad rows / weight columns ----
    padded_rows = _round_up(rows, tm)
    if padded_rows != rows:
        x2 = jnp.pad(x2, ((0, padded_rows - rows), (0, 0)))

    gamma2 = gamma.astype(jnp.float32).reshape(1, D)
    beta2 = beta.astype(jnp.float32).reshape(1, D)
    w2 = w.astype(mm_dtype)
    b2 = b.astype(jnp.float32).reshape(1, D)
    if D_pad != D:
        w2 = jnp.pad(w2, ((0, 0), (0, D_pad - D)))
        b2 = jnp.pad(b2, ((0, 0), (0, D_pad - D)))

    grid = (padded_rows // tm, D_pad // tn)
    n_row_tiles = grid[0]

    cost = pl.CostEstimate(
        flops=int(2 * padded_rows * D * D_pad + 8 * padded_rows * D),
        transcendentals=int(padded_rows),
        bytes_accessed=int(padded_rows * D * x_item
                           + n_row_tiles * D * D_pad * w_item
                           + padded_rows * D_pad * x_item
                           + (2 * D + D_pad) * 4),
    )

    def _call(single_buffer_x):
        # x only changes every D_pad/tn steps and is only read at j == 0:
        # request a single buffer to free tm*D bytes of VMEM.
        if single_buffer_x:
            x_spec = pl.BlockSpec((tm, D), lambda i, j: (i, 0),
                                  pipeline_mode=pl.Buffered(1))
        else:
            x_spec = pl.BlockSpec((tm, D), lambda i, j: (i, 0))
        return pl.pallas_call(
            _prenorm_kernel,
            out_shape=jax.ShapeDtypeStruct((padded_rows, D_pad), x.dtype),
            grid_spec=pltpu.PrefetchScalarGridSpec(
                num_scalar_prefetch=0,
                grid=grid,
                in_specs=[
                    x_spec,                                        # x row tile
                    pl.BlockSpec((1, D), lambda i, j: (0, 0)),     # gamma (f32)
                    pl.BlockSpec((1, D), lambda i, j: (0, 0)),     # beta  (f32)
                    pl.BlockSpec((D, tn), lambda i, j: (0, j)),    # W column tile
                    pl.BlockSpec((1, tn), lambda i, j: (0, j)),    # bias column tile (f32)
                ],
                out_specs=pl.BlockSpec((tm, tn), lambda i, j: (i, j)),
                scratch_shapes=[pltpu.VMEM((tm, D), mm_dtype)],    # LayerNorm(x) cache
            ),
            compiler_params=pltpu.CompilerParams(
                # Rows are independent (megacore-shardable); the column axis
                # carries the y-scratch dependency (init at j==0) -> arbitrary.
                dimension_semantics=("parallel", "arbitrary"),
                vmem_limit_bytes=vmem_limit,
            ),
            cost_estimate=cost,
        )(x2, gamma2, beta2, w2, b2)

    try:
        out2 = _call(True)
    except Exception:
        out2 = _call(False)   # pipeline_mode not supported -> default buffering

    if padded_rows != rows or D_pad != D:
        out2 = out2[:rows, :D]
    return out2.reshape(B, N, D)


def _reference(x, gamma, beta, w, b):
    xf = x.astype(jnp.float32)
    mean = jnp.mean(xf, axis=-1, keepdims=True)
    var = jnp.mean((xf - mean) ** 2, axis=-1, keepdims=True)
    xn = (xf - mean) / jnp.sqrt(var + LN_EPS)
    y = xn * gamma.astype(jnp.float32) + beta.astype(jnp.float32)
    out = y @ w.astype(jnp.float32) + b.astype(jnp.float32)
    return out.astype(x.dtype)


def _make_params(key, D, dtype=jnp.float32):
    k_g, k_b, k_w, k_lb = jax.random.split(key, 4)
    gamma = (1.0 + 0.01 * jax.random.normal(k_g, (D,), dtype=jnp.float32)).astype(dtype)
    beta = (0.01 * jax.random.normal(k_b, (D,), dtype=jnp.float32)).astype(dtype)
    w = (jax.random.normal(k_w, (D, D), dtype=jnp.float32) / jnp.sqrt(D)).astype(dtype)
    b = (0.01 * jax.random.normal(k_lb, (D,), dtype=jnp.float32)).astype(dtype)
    return gamma, beta, w, b


if __name__ == "__main__":
    key = jax.random.PRNGKey(0)
    k_x1, k_p1, k_x2, k_p2 = jax.random.split(key, 4)

    # --- small demo shape consistent with the module (dim = hidden size) ---
    B, N, D = 2, 8, 32
    x = jax.random.normal(k_x1, (B, N, D), dtype=jnp.float32)
    gamma, beta, w, b = _make_params(k_p1, D)

    out = prenorm(x, gamma, beta, w, b)
    jax.block_until_ready(out)
    ref = _reference(x, gamma, beta, w, b)
    assert out.shape == (B, N, D)
    assert jnp.allclose(out, ref, atol=1e-4, rtol=1e-4), "mismatch vs reference (small)"

    # --- tiled path: multiple row tiles + row padding + multiple column tiles
    #     (j > 0 reuses the cached LayerNorm scratch) ---
    B2, N2, D2 = 2, 68, 512          # rows = 136 -> 3 row tiles of 64 (padded to 192)
    x_b = jax.random.normal(k_x2, (B2, N2, D2), dtype=jnp.float32)
    gamma_b, beta_b, w_b, b_b = _make_params(k_p2, D2)

    out_b = prenorm(x_b, gamma_b, beta_b, w_b, b_b, block_rows=64, block_cols=256)
    jax.block_until_ready(out_b)
    ref_b = _reference(x_b, gamma_b, beta_b, w_b, b_b)
    assert out_b.shape == (B2, N2, D2)
    assert jnp.allclose(out_b, ref_b, atol=1e-4, rtol=1e-4), "mismatch vs reference (tiled)"

    # --- optional bf16 matmul operands on an f32 model (f32 accumulation) ---
    out_c = prenorm(x_b, gamma_b, beta_b, w_b, b_b, block_rows=64, block_cols=256,
                    matmul_dtype=jnp.bfloat16)
    jax.block_until_ready(out_c)
    assert jnp.allclose(out_c, ref_b, atol=5e-2, rtol=5e-2), "mismatch (bf16 matmul path)"

    print("KERNEL_OK")
</pallas_src>

<mosaic_0001>
module attributes {stable_mosaic.version = 11 : i64} {
  func.func @_prenorm_kernel(%arg0: i32, %arg1: i32, %arg2: memref<8x32xf32, #tpu.memory_space<vmem>>, %arg3: memref<1x32xf32, #tpu.memory_space<vmem>>, %arg4: memref<1x32xf32, #tpu.memory_space<vmem>>, %arg5: memref<32x128xf32, #tpu.memory_space<vmem>>, %arg6: memref<1x128xf32, #tpu.memory_space<vmem>>, %arg7: memref<8x128xf32, #tpu.memory_space<vmem>>, %arg8: memref<8x32xf32, #tpu.memory_space<vmem>>) attributes {dimension_semantics = [#tpu.dimension_semantics<parallel>, #tpu.dimension_semantics<arbitrary>], iteration_bounds = array<i64: 2, 1>, scalar_prefetch = 0 : i64, scratch_operands = 1 : i64, tpu.core_type = #tpu.core_type<tc>, window_params = [{pipeline_mode = #tpu.pipeline_mode<synchronous>, transform_indices = @transform_0, window_bounds = array<i64: 8, 32>}, {pipeline_mode = #tpu.pipeline_mode<synchronous>, transform_indices = @transform_1, window_bounds = array<i64: 1, 32>}, {pipeline_mode = #tpu.pipeline_mode<synchronous>, transform_indices = @transform_2, window_bounds = array<i64: 1, 32>}, {transform_indices = @transform_3, window_bounds = array<i64: 32, 128>}, {transform_indices = @transform_4, window_bounds = array<i64: 1, 128>}, {transform_indices = @transform_5, window_bounds = array<i64: 8, 128>}]} {
    %c0_i32 = arith.constant 0 : i32
    %0 = arith.cmpi eq, %arg1, %c0_i32 : i32
    %1 = arith.extui %0 : i1 to i32
    %c0_i32_0 = arith.constant 0 : i32
    %2 = arith.cmpi ne, %1, %c0_i32_0 : i32
    scf.if %2 {
      %c0_8 = arith.constant 0 : index
      %c0_9 = arith.constant 0 : index
      %10 = vector.load %arg2[%c0_8, %c0_9] : memref<8x32xf32, #tpu.memory_space<vmem>>, vector<8x32xf32>
      %cst_10 = arith.constant dense<0.000000e+00> : vector<8xf32>
      %11 = vector.multi_reduction <add>, %10, %cst_10 [1] : vector<8x32xf32> to vector<8xf32>
      %12 = vector.shape_cast %11 : vector<8xf32> to vector<8x1xf32>
      %cst_11 = arith.constant 3.125000e-02 : f32
      %13 = vector.broadcast %cst_11 : f32 to vector<8x1xf32>
      %14 = arith.mulf %12, %13 : vector<8x1xf32>
      %15 = arith.mulf %10, %10 : vector<8x32xf32>
      %cst_12 = arith.constant dense<0.000000e+00> : vector<8xf32>
      %16 = vector.multi_reduction <add>, %15, %cst_12 [1] : vector<8x32xf32> to vector<8xf32>
      %17 = vector.shape_cast %16 : vector<8xf32> to vector<8x1xf32>
      %cst_13 = arith.constant 3.125000e-02 : f32
      %18 = vector.broadcast %cst_13 : f32 to vector<8x1xf32>
      %19 = arith.mulf %17, %18 : vector<8x1xf32>
      %20 = arith.mulf %14, %14 : vector<8x1xf32>
      %21 = arith.subf %19, %20 : vector<8x1xf32>
      %cst_14 = arith.constant 0.000000e+00 : f32
      %22 = vector.broadcast %cst_14 : f32 to vector<8x1xf32>
      %23 = arith.maximumf %21, %22 : vector<8x1xf32>
      %cst_15 = arith.constant 9.99999974E-6 : f32
      %24 = vector.broadcast %cst_15 : f32 to vector<8x1xf32>
      %25 = arith.addf %23, %24 : vector<8x1xf32>
      %26 = math.rsqrt %25 : vector<8x1xf32>
      %27 = vector.broadcast %14 : vector<8x1xf32> to vector<8x32xf32>
      %28 = arith.subf %10, %27 : vector<8x32xf32>
      %29 = vector.broadcast %26 : vector<8x1xf32> to vector<8x32xf32>
      %30 = arith.mulf %28, %29 : vector<8x32xf32>
      %c0_16 = arith.constant 0 : index
      %c0_17 = arith.constant 0 : index
      %31 = vector.load %arg3[%c0_16, %c0_17] : memref<1x32xf32, #tpu.memory_space<vmem>>, vector<1x32xf32>
      %32 = vector.broadcast %31 : vector<1x32xf32> to vector<8x32xf32>
      %33 = arith.mulf %30, %32 : vector<8x32xf32>
      %c0_18 = arith.constant 0 : index
      %c0_19 = arith.constant 0 : index
      %34 = vector.load %arg4[%c0_18, %c0_19] : memref<1x32xf32, #tpu.memory_space<vmem>>, vector<1x32xf32>
      %35 = vector.broadcast %34 : vector<1x32xf32> to vector<8x32xf32>
      %36 = arith.addf %33, %35 : vector<8x32xf32>
      %c0_20 = arith.constant 0 : index
      %c0_21 = arith.constant 0 : index
      %37 = vector.load %arg8[%c0_20, %c0_21] : memref<8x32xf32, #tpu.memory_space<vmem>>, vector<8x32xf32>
      tpu.vector_store %arg8[%c0_20, %c0_21], %36 {strides = array<i32>} : memref<8x32xf32, #tpu.memory_space<vmem>>, vector<8x32xf32>,
    } else {
    }
    %c0 = arith.constant 0 : index
    %c0_1 = arith.constant 0 : index
    %3 = vector.load %arg8[%c0, %c0_1] : memref<8x32xf32, #tpu.memory_space<vmem>>, vector<8x32xf32>
    %c0_2 = arith.constant 0 : index
    %c0_3 = arith.constant 0 : index
    %4 = vector.load %arg5[%c0_2, %c0_3] : memref<32x128xf32, #tpu.memory_space<vmem>>, vector<32x128xf32>
    %cst = arith.constant dense<0.000000e+00> : vector<8x128xf32>
    %5 = tpu.matmul %3, %4, %cst {dimension_numbers = #tpu.dot_dimension_numbers<[1], [0], [0], [1], [0, 0, 1, 1], [], []>} : vector<8x32xf32>, vector<32x128xf32>, vector<8x128xf32> -> vector<8x128xf32>
    %c0_4 = arith.constant 0 : index
    %c0_5 = arith.constant 0 : index
    %6 = vector.load %arg6[%c0_4, %c0_5] : memref<1x128xf32, #tpu.memory_space<vmem>>, vector<1x128xf32>
    %7 = vector.broadcast %6 : vector<1x128xf32> to vector<8x128xf32>
    %8 = arith.addf %5, %7 : vector<8x128xf32>
    %c0_6 = arith.constant 0 : index
    %c0_7 = arith.constant 0 : index
    %9 = vector.load %arg7[%c0_6, %c0_7] : memref<8x128xf32, #tpu.memory_space<vmem>>, vector<8x128xf32>
    tpu.vector_store %arg7[%c0_6, %c0_7], %8 {strides = array<i32>} : memref<8x128xf32, #tpu.memory_space<vmem>>, vector<8x128xf32>,
    return
  }
  func.func @transform_0(%arg0: i32, %arg1: i32) -> (i32, i32) {
    %c0_i32 = arith.constant 0 : i32
    %c0_i32_0 = arith.constant 0 : i32
    return %arg0, %c0_i32 : i32, i32
  }
  func.func @transform_1(%arg0: i32, %arg1: i32) -> (i32, i32) {
    %c0_i32 = arith.constant 0 : i32
    %c0_i32_0 = arith.constant 0 : i32
    %c0_i32_1 = arith.constant 0 : i32
    return %c0_i32, %c0_i32_0 : i32, i32
  }
  func.func @transform_2(%arg0: i32, %arg1: i32) -> (i32, i32) {
    %c0_i32 = arith.constant 0 : i32
    %c0_i32_0 = arith.constant 0 : i32
    %c0_i32_1 = arith.constant 0 : i32
    return %c0_i32, %c0_i32_0 : i32, i32
  }
  func.func @transform_3(%arg0: i32, %arg1: i32) -> (i32, i32) {
    %c0_i32 = arith.constant 0 : i32
    %c0_i32_0 = arith.constant 0 : i32
    return %c0_i32, %arg1 : i32, i32
  }
  func.func @transform_4(%arg0: i32, %arg1: i32) -> (i32, i32) {
    %c0_i32 = arith.constant 0 : i32
    %c0_i32_0 = arith.constant 0 : i32
    return %c0_i32, %arg1 : i32, i32
  }
  func.func @transform_5(%arg0: i32, %arg1: i32) -> (i32, i32) {
    %c0_i32 = arith.constant 0 : i32
    return %arg0, %arg1 : i32, i32
  }
}

module attributes {stable_mosaic.version = 11 : i64} {
  func.func @_prenorm_kernel(%arg0: i32, %arg1: i32, %arg2: memref<8x32xf32, #tpu.memory_space<vmem>>, %arg3: memref<1x32xf32, #tpu.memory_space<vmem>>, %arg4: memref<1x32xf32, #tpu.memory_space<vmem>>, %arg5: memref<32x128xf32, #tpu.memory_space<vmem>>, %arg6: memref<1x128xf32, #tpu.memory_space<vmem>>, %arg7: memref<8x128xf32, #tpu.memory_space<vmem>>, %arg8: memref<8x32xf32, #tpu.memory_space<vmem>>) attributes {dimension_semantics = [#tpu.dimension_semantics<parallel>, #tpu.dimension_semantics<arbitrary>], iteration_bounds = array<i64: 2, 1>, scalar_prefetch = 0 : i64, scratch_operands = 1 : i64, tpu.core_type = #tpu.core_type<tc>, window_params = [{transform_indices = @transform_0, window_bounds = array<i64: 8, 32>}, {pipeline_mode = #tpu.pipeline_mode<synchronous>, transform_indices = @transform_1, window_bounds = array<i64: 1, 32>}, {pipeline_mode = #tpu.pipeline_mode<synchronous>, transform_indices = @transform_2, window_bounds = array<i64: 1, 32>}, {transform_indices = @transform_3, window_bounds = array<i64: 32, 128>}, {transform_indices = @transform_4, window_bounds = array<i64: 1, 128>}, {transform_indices = @transform_5, window_bounds = array<i64: 8, 128>}]} {
    %c0_i32 = arith.constant 0 : i32
    %0 = arith.cmpi eq, %arg1, %c0_i32 : i32
    %1 = arith.extui %0 : i1 to i32
    %c0_i32_0 = arith.constant 0 : i32
    %2 = arith.cmpi ne, %1, %c0_i32_0 : i32
    scf.if %2 {
      %c0_8 = arith.constant 0 : index
      %c0_9 = arith.constant 0 : index
      %10 = vector.load %arg2[%c0_8, %c0_9] : memref<8x32xf32, #tpu.memory_space<vmem>>, vector<8x32xf32>
      %cst_10 = arith.constant dense<0.000000e+00> : vector<8xf32>
      %11 = vector.multi_reduction <add>, %10, %cst_10 [1] : vector<8x32xf32> to vector<8xf32>
      %12 = vector.shape_cast %11 : vector<8xf32> to vector<8x1xf32>
      %cst_11 = arith.constant 3.125000e-02 : f32
      %13 = vector.broadcast %cst_11 : f32 to vector<8x1xf32>
      %14 = arith.mulf %12, %13 : vector<8x1xf32>
      %15 = arith.mulf %10, %10 : vector<8x32xf32>
      %cst_12 = arith.constant dense<0.000000e+00> : vector<8xf32>
      %16 = vector.multi_reduction <add>, %15, %cst_12 [1] : vector<8x32xf32> to vector<8xf32>
      %17 = vector.shape_cast %16 : vector<8xf32> to vector<8x1xf32>
      %cst_13 = arith.constant 3.125000e-02 : f32
      %18 = vector.broadcast %cst_13 : f32 to vector<8x1xf32>
      %19 = arith.mulf %17, %18 : vector<8x1xf32>
      %20 = arith.mulf %14, %14 : vector<8x1xf32>
      %21 = arith.subf %19, %20 : vector<8x1xf32>
      %cst_14 = arith.constant 0.000000e+00 : f32
      %22 = vector.broadcast %cst_14 : f32 to vector<8x1xf32>
      %23 = arith.maximumf %21, %22 : vector<8x1xf32>
      %cst_15 = arith.constant 9.99999974E-6 : f32
      %24 = vector.broadcast %cst_15 : f32 to vector<8x1xf32>
      %25 = arith.addf %23, %24 : vector<8x1xf32>
      %26 = math.rsqrt %25 : vector<8x1xf32>
      %27 = vector.broadcast %14 : vector<8x1xf32> to vector<8x32xf32>
      %28 = arith.subf %10, %27 : vector<8x32xf32>
      %29 = vector.broadcast %26 : vector<8x1xf32> to vector<8x32xf32>
      %30 = arith.mulf %28, %29 : vector<8x32xf32>
      %c0_16 = arith.constant 0 : index
      %c0_17 = arith.constant 0 : index
      %31 = vector.load %arg3[%c0_16, %c0_17] : memref<1x32xf32, #tpu.memory_space<vmem>>, vector<1x32xf32>
      %32 = vector.broadcast %31 : vector<1x32xf32> to vector<8x32xf32>
      %33 = arith.mulf %30, %32 : vector<8x32xf32>
      %c0_18 = arith.constant 0 : index
      %c0_19 = arith.constant 0 : index
      %34 = vector.load %arg4[%c0_18, %c0_19] : memref<1x32xf32, #tpu.memory_space<vmem>>, vector<1x32xf32>
      %35 = vector.broadcast %34 : vector<1x32xf32> to vector<8x32xf32>
      %36 = arith.addf %33, %35 : vector<8x32xf32>
      %c0_20 = arith.constant 0 : index
      %c0_21 = arith.constant 0 : index
      %37 = vector.load %arg8[%c0_20, %c0_21] : memref<8x32xf32, #tpu.memory_space<vmem>>, vector<8x32xf32>
      tpu.vector_store %arg8[%c0_20, %c0_21], %36 {strides = array<i32>} : memref<8x32xf32, #tpu.memory_space<vmem>>, vector<8x32xf32>,
    } else {
    }
    %c0 = arith.constant 0 : index
    %c0_1 = arith.constant 0 : index
    %3 = vector.load %arg8[%c0, %c0_1] : memref<8x32xf32, #tpu.memory_space<vmem>>, vector<8x32xf32>
    %c0_2 = arith.constant 0 : index
    %c0_3 = arith.constant 0 : index
    %4 = vector.load %arg5[%c0_2, %c0_3] : memref<32x128xf32, #tpu.memory_space<vmem>>, vector<32x128xf32>
    %cst = arith.constant dense<0.000000e+00> : vector<8x128xf32>
    %5 = tpu.matmul %3, %4, %cst {dimension_numbers = #tpu.dot_dimension_numbers<[1], [0], [0], [1], [0, 0, 1, 1], [], []>} : vector<8x32xf32>, vector<32x128xf32>, vector<8x128xf32> -> vector<8x128xf32>
    %c0_4 = arith.constant 0 : index
    %c0_5 = arith.constant 0 : index
    %6 = vector.load %arg6[%c0_4, %c0_5] : memref<1x128xf32, #tpu.memory_space<vmem>>, vector<1x128xf32>
    %7 = vector.broadcast %6 : vector<1x128xf32> to vector<8x128xf32>
    %8 = arith.addf %5, %7 : vector<8x128xf32>
    %c0_6 = arith.constant 0 : index
    %c0_7 = arith.constant 0 : index
    %9 = vector.load %arg7[%c0_6, %c0_7] : memref<8x128xf32, #tpu.memory_space<vmem>>, vector<8x128xf32>
    tpu.vector_store %arg7[%c0_6, %c0_7], %8 {strides = array<i32>} : memref<8x128xf32, #tpu.memory_space<vmem>>, vector<8x128xf32>,
    return
  }
  func.func @transform_0(%arg0: i32, %arg1: i32) -> (i32, i32) {
    %c0_i32 = arith.constant 0 : i32
    %c0_i32_0 = arith.constant 0 : i32
    return %arg0, %c0_i32 : i32, i32
  }
  func.func @transform_1(%arg0: i32, %arg1: i32) -> (i32, i32) {
    %c0_i32 = arith.constant 0 : i32
    %c0_i32_0 = arith.constant 0 : i32
    %c0_i32_1 = arith.constant 0 : i32
    return %c0_i32, %c0_i32_0 : i32, i32
  }
  func.func @transform_2(%arg0: i32, %arg1: i32) -> (i32, i32) {
    %c0_i32 = arith.constant 0 : i32
    %c0_i32_0 = arith.constant 0 : i32
    %c0_i32_1 = arith.constant 0 : i32
    return %c0_i32, %c0_i32_0 : i32, i32
  }
  func.func @transform_3(%arg0: i32, %arg1: i32) -> (i32, i32) {
    %c0_i32 = arith.constant 0 : i32
    %c0_i32_0 = arith.constant 0 : i32
    return %c0_i32, %arg1 : i32, i32
  }
  func.func @transform_4(%arg0: i32, %arg1: i32) -> (i32, i32) {
    %c0_i32 = arith.constant 0 : i32
    %c0_i32_0 = arith.constant 0 : i32
    return %c0_i32, %arg1 : i32, i32
  }
  func.func @transform_5(%arg0: i32, %arg1: i32) -> (i32, i32) {
    %c0_i32 = arith.constant 0 : i32
    return %arg0, %arg1 : i32, i32
  }
}

</mosaic_0001>

<llo_original>
// kernel: tpu_custom_call.1
$region0: #{tpu_custom_call.1}
  #allocation0 [shape = 'u32[]', space=smem, size = 0x4, offset = 0x4, fixed_abs, tag = 'smem constant byte address 0x4 - core index']
  #allocation1 [shape = 'u32[72,128]{1,0:T(1,128)}', space=vmem, size = 0x9000, scoped, tag = 'internal scratch']
  #allocation2 [shape = 'f32[8,32]{1,0:T(8,128)}', space=vmem, size = 0x1000, scoped, tag = 'scratch operand']
  %s0 = inlined_call_operand.hbm [shape: f32[16,32], index: 0, kind: input, shape index: {}]
  %s1 = inlined_call_operand.hbm [shape: f32[1,32], index: 1, kind: input, shape index: {}]
  %s2 = inlined_call_operand.vmem [shape: f32[1,32], index: 2, kind: input, shape index: {}]
  %s3 = inlined_call_operand.hbm [shape: f32[32,128], index: 3, kind: input, shape index: {}]
  %s4 = inlined_call_operand.vmem [shape: f32[1,128], index: 4, kind: input, shape index: {}]
  %s5 = inlined_call_operand.hbm [shape: f32[16,128], index: 5, kind: output, shape index: {}]
  %s6 = sld [smem:[#allocation0]]
  $region69: #{tpu_custom_call.1} parent=0
    _
  %s8 = ssub.s32 1, %s6
  %s9 = scalar_select 0, %s8, %s6
  $region1: #{tpu_custom_call.1} parent=0
    #allocation3 [shape = 'u8[4096]{0}', space=vmem, size = 0x1000, scoped, tag = 'input window, operand 0, single buffered']
    #allocation4 [shape = 's32[2]{0}', space=sflag, size = 0x8, scoped, tag = 'scoped memory for tpu_custom_call.1']
    #allocation5 [shape = 's32[2]{0}', space=sflag, size = 0x8, scoped, tag = 'scoped memory for tpu_custom_call.1']
    #allocation6 [shape = 'u8[512]{0}', space=vmem, size = 0x400, scoped, tag = 'input window, operand 1, single buffered']
    #allocation7 [shape = 's32[1]{0}', space=sflag, size = 0x4, scoped, tag = 'scoped memory for tpu_custom_call.1']
    #allocation8 [shape = 'u8[16384]{0}', space=vmem, size = 0x4000, scoped, tag = 'input window, operand 3, single buffered']
    #allocation9 [shape = 'u8[8192]{0}', space=vmem, size = 0x2000, scoped, tag = 'output window, operand 0']
    %10 = vsyncpa [#allocation4], 0
    %11 = vsyncpa [#allocation7], 0
    %12 = vsyncpa [#allocation5], 0
    %s13 = scalar_lea.sflag [#allocation5], 1
    %14 = vsyncpa %s13, 0
    loop: start=0, step=1, limit=4
    $region2: #{tpu_custom_call.1} parent=1 // loop_pre_header
      _
    $region3: #{tpu_custom_call.1} parent=1 // loop_header
      %s16 = sphi 0, %s20
      %p17 = scmp.ge.s32.totalorder %s16, 4
      %s23 = sphi 0, %s35
      %s24 = sphi 0, %s31
      %s25 = sphi 0, %s23
      %s26 = sphi 0, %s24
      %s27 = sphi 0, %s25
      %s28 = sphi 0, %s26
      %s38 = sphi 0, %s40
      %s41 = sphi 0, %s38
      %s42 = sphi 0, %s41
      %s58 = sphi 0, %s42
      %s62 = sphi 0, %s62
      %s64 = sphi 0, %s62
      %s65 = sphi 0, %s64
      %s79 = sphi 0, %s65
      %s83 = sphi 0, %s83
      %s85 = sphi 0, %s83
      %s86 = sphi 0, %s85
      %s100 = sphi 0, %s86
      %s106 = sphi 0, %s108
      %s109 = sphi 0, %s106
      %s110 = sphi 0, %s109
      %s126 = sphi 0, %s110
      %s132 = sphi 0, %s134
      %s135 = sphi 0, %s132
      %s136 = sphi 0, %s135
      %s152 = sphi 0, %s136
      %s160 = sphi 0, %s162
      %s163 = sphi 0, %s160
      %s164 = sphi 0, %s163
      %s180 = sphi 0, %s164
    $region4: #{tpu_custom_call.1} parent=1 // loop_header_branch
      %19 = sbr.rel (%p17) target = $region8
    $region5: #{tpu_custom_call.1} parent=1 // loop_body
      %s21 = ssub.s32 %s16, 1
      %s22 = ssub.s32 %s16, 2
      %s29 = sadd.s32 1, %s24
      %p30 = scmp.ge.s32.totalorder %s29, 1
      %s31 = scalar_select %p30, 0, %s29
      %s32 = sadd.s32 1, %s23
      %s33 = scalar_select %p30, %s32, %s23
      %p34 = scmp.ge.s32.totalorder %s33, 2
      %s35 = scalar_select %p34, 0, %s33
      %s36 = ssub.s32 %s23, %s35
      %p37 = scmp.eq.s32.totalorder %s36, 0
      %s39 = sadd.s32 %s38, 1
      %s40 = scalar_select %p37, %s38, %s39
      %p43 = pneg %p37
      %p44 = scmp.eq.s32.totalorder %s16, 1
      %p45 = por %p43, %p44
      %p46 = scmp.ne.s32.totalorder %s38, %s41
      %p47 = scmp.eq.s32.totalorder %s16, 0
      %p48 = por %p46, %p47
      %p49 = scmp.ne.s32.totalorder %s38, %s41
      %p50 = scmp.eq.s32.totalorder %s21, 1
      %p51 = por %p49, %p50
      %p52 = scmp.ne.s32.totalorder %s41, %s42
      %p53 = scmp.eq.s32.totalorder %s21, 0
      %p54 = por %p52, %p53
      %p55 = scmp.ne.s32.totalorder %s41, %s42
      %p56 = scmp.eq.s32.totalorder %s22, 1
      %p57 = por %p55, %p56
      %p59 = scmp.ne.s32.totalorder %s42, %s58
      %p60 = scmp.eq.s32.totalorder %s22, 0
      %p61 = por %p59, %p60
      %s63 = sadd.s32 %s62, 1
      %p66 = scmp.eq.s32.totalorder %s16, 1
      %p67 = scmp.ne.s32.totalorder %s62, %s64
      %p68 = scmp.eq.s32.totalorder %s16, 0
      %p69 = por %p67, %p68
      %p70 = scmp.ne.s32.totalorder %s62, %s64
      %p71 = scmp.eq.s32.totalorder %s21, 1
      %p72 = por %p70, %p71
      %p73 = scmp.ne.s32.totalorder %s64, %s65
      %p74 = scmp.eq.s32.totalorder %s21, 0
      %p75 = por %p73, %p74
      %p76 = scmp.ne.s32.totalorder %s64, %s65
      %p77 = scmp.eq.s32.totalorder %s22, 1
      %p78 = por %p76, %p77
      %p80 = scmp.ne.s32.totalorder %s65, %s79
      %p81 = scmp.eq.s32.totalorder %s22, 0
      %p82 = por %p80, %p81
      %s84 = sadd.s32 %s83, 1
      %p87 = scmp.eq.s32.totalorder %s16, 1
      %p88 = scmp.ne.s32.totalorder %s83, %s85
      %p89 = scmp.eq.s32.totalorder %s16, 0
      %p90 = por %p88, %p89
      %p91 = scmp.ne.s32.totalorder %s83, %s85
      %p92 = scmp.eq.s32.totalorder %s21, 1
      %p93 = por %p91, %p92
      %p94 = scmp.ne.s32.totalorder %s85, %s86
      %p95 = scmp.eq.s32.totalorder %s21, 0
      %p96 = por %p94, %p95
      %p97 = scmp.ne.s32.totalorder %s85, %s86
      %p98 = scmp.eq.s32.totalorder %s22, 1
      %p99 = por %p97, %p98
      %p101 = scmp.ne.s32.totalorder %s86, %s100
      %p102 = scmp.eq.s32.totalorder %s22, 0
      %p103 = por %p101, %p102
      %s104 = ssub.s32 %s24, %s31
      %p105 = scmp.eq.s32.totalorder %s104, 0
      %s107 = sadd.s32 %s106, 1
      %s108 = scalar_select %p105, %s106, %s107
      %p111 = pneg %p105
      %p112 = scmp.eq.s32.totalorder %s16, 1
      %p113 = por %p111, %p112
      %p114 = scmp.ne.s32.totalorder %s106, %s109
      %p115 = scmp.eq.s32.totalorder %s16, 0
      %p116 = por %p114, %p115
      %p117 = scmp.ne.s32.totalorder %s106, %s109
      %p118 = scmp.eq.s32.totalorder %s21, 1
      %p119 = por %p117, %p118
      %p120 = scmp.ne.s32.totalorder %s109, %s110
      %p121 = scmp.eq.s32.totalorder %s21, 0
      %p122 = por %p120, %p121
      %p123 = scmp.ne.s32.totalorder %s109, %s110
      %p124 = scmp.eq.s32.totalorder %s22, 1
      %p125 = por %p123, %p124
      %p127 = scmp.ne.s32.totalorder %s110, %s126
      %p128 = scmp.eq.s32.totalorder %s22, 0
      %p129 = por %p127, %p128
      %s130 = ssub.s32 %s24, %s31
      %p131 = scmp.eq.s32.totalorder %s130, 0
      %s133 = sadd.s32 %s132, 1
      %s134 = scalar_select %p131, %s132, %s133
      %p137 = pneg %p131
      %p138 = scmp.eq.s32.totalorder %s16, 1
      %p139 = por %p137, %p138
      %p140 = scmp.ne.s32.totalorder %s132, %s135
      %p141 = scmp.eq.s32.totalorder %s16, 0
      %p142 = por %p140, %p141
      %p143 = scmp.ne.s32.totalorder %s132, %s135
      %p144 = scmp.eq.s32.totalorder %s21, 1
      %p145 = por %p143, %p144
      %p146 = scmp.ne.s32.totalorder %s135, %s136
      %p147 = scmp.eq.s32.totalorder %s21, 0
      %p148 = por %p146, %p147
      %p149 = scmp.ne.s32.totalorder %s135, %s136
      %p150 = scmp.eq.s32.totalorder %s22, 1
      %p151 = por %p149, %p150
      %p153 = scmp.ne.s32.totalorder %s136, %s152
      %p154 = scmp.eq.s32.totalorder %s22, 0
      %p155 = por %p153, %p154
      %s156 = ssub.s32 %s23, %s35
      %s157 = ssub.s32 %s24, %s31
      %s158 = sor.u32 %s156, %s157
      %p159 = scmp.eq.s32.totalorder %s158, 0
      %s161 = sadd.s32 %s160, 1
      %s162 = scalar_select %p159, %s160, %s161
      %p165 = pneg %p159
      %p166 = scmp.eq.s32.totalorder %s16, 1
      %p167 = por %p165, %p166
      %p168 = scmp.ne.s32.totalorder %s160, %s163
      %p169 = scmp.eq.s32.totalorder %s16, 0
      %p170 = por %p168, %p169
      %p171 = scmp.ne.s32.totalorder %s160, %s163
      %p172 = scmp.eq.s32.totalorder %s21, 1
      %p173 = por %p171, %p172
      %p174 = scmp.ne.s32.totalorder %s163, %s164
      %p175 = scmp.eq.s32.totalorder %s21, 0
      %p176 = por %p174, %p175
      %p177 = scmp.ne.s32.totalorder %s163, %s164
      %p178 = scmp.eq.s32.totalorder %s22, 1
      %p179 = por %p177, %p178
      %p181 = scmp.ne.s32.totalorder %s164, %s180
      %p182 = scmp.eq.s32.totalorder %s22, 0
      %p183 = por %p181, %p182
      %p184 = scmp.le.s32.totalorder 1, %s16
      %p185 = scmp.lt.s32.totalorder %s16, 3
      %p186 = pnand %p184, %p185
      %p187 = pneg %p186
      // Predicated region
      $region9: #{tpu_custom_call.1} parent=5 // pred_check
        _
      $region10: #{tpu_custom_call.1} parent=5 // pred_check_branch
        %189 = sbr.rel (%p186) target = $region12
      $region11: #{tpu_custom_call.1} parent=5 // pred_region
        %s190 = ssub.s32 %s16, 1
        // Predicated region
        $region13: #{tpu_custom_call.1} parent=11 // pred_check
          %p191 = pneg %p54
        $region14: #{tpu_custom_call.1} parent=11 // pred_check_branch
          %193 = sbr.rel (%p191) target = $region16
        $region15: #{tpu_custom_call.1} parent=11 // pred_region
          %195 = vsyncadd [#allocation4], 0
          %s196 = smul.addr %s25, 8
          %s197 = scalar_lea.hbm %s0, %s196
          %s199 = sshll.u32 %s197, 4
          %s200 = int_to_ptr.hbm [resolvable:$true] %s199
          %s201 = sshll.u32 [#allocation3], 4
          %s202 = int_to_ptr.vmem [resolvable:$true] %s201
          %204 = dma.hbm_to_vmem [thread:$0]  %s200, 128, %s202, [#allocation4]
        $region16: #{tpu_custom_call.1} parent=11 // pred_fallthru
          _
        // Predicated region
        $region17: #{tpu_custom_call.1} parent=11 // pred_check
          %p205 = pneg %p75
        $region18: #{tpu_custom_call.1} parent=11 // pred_check_branch
          %207 = sbr.rel (%p205) target = $region20
        $region19: #{tpu_custom_call.1} parent=11 // pred_region
          %209 = vsyncadd [#allocation7], 0
          %s211 = sshll.u32 %s1, 4
          %s212 = int_to_ptr.hbm [resolvable:$true] %s211
          %s213 = sshll.u32 [#allocation6], 4
          %s214 = int_to_ptr.vmem [resolvable:$true] %s213
          %216 = dma.hbm_to_vmem [thread:$0]  %s212, 16, %s214, [#allocation7]
        $region20: #{tpu_custom_call.1} parent=11 // pred_fallthru
          _
        // Predicated region
        $region21: #{tpu_custom_call.1} parent=11 // pred_check
          %p217 = pneg %p96
        $region22: #{tpu_custom_call.1} parent=11 // pred_check_branch
          %219 = sbr.rel (%p217) target = $region24
        $region23: #{tpu_custom_call.1} parent=11 // pred_region
          _
        $region24: #{tpu_custom_call.1} parent=11 // pred_fallthru
          _
        // Predicated region
        $region25: #{tpu_custom_call.1} parent=11 // pred_check
          %p220 = pneg %p122
        $region26: #{tpu_custom_call.1} parent=11 // pred_check_branch
          %222 = sbr.rel (%p220) target = $region28
        $region27: #{tpu_custom_call.1} parent=11 // pred_region
          %224 = vsyncadd [#allocation7], 0
          %s225 = smul.addr %s26, 8
          %s226 = scalar_lea.hbm %s3, %s225
          %s227 = sshll.u32 %s226, 4
          %s228 = int_to_ptr.hbm [resolvable:$true] %s227
          %s229 = sshll.u32 [#allocation8], 4
          %s230 = int_to_ptr.vmem [resolvable:$true] %s229
          %235 = dma.hbm_to_vmem [thread:$0]  %s228, 512, %s230, [#allocation7], 128, 128, 8
        $region28: #{tpu_custom_call.1} parent=11 // pred_fallthru
          _
        // Predicated region
        $region29: #{tpu_custom_call.1} parent=11 // pred_check
          %p236 = pneg %p148
        $region30: #{tpu_custom_call.1} parent=11 // pred_check_branch
          %238 = sbr.rel (%p236) target = $region32
        $region31: #{tpu_custom_call.1} parent=11 // pred_region
          %p239 = scmp.lt.s32.totalorder %s26, 0
          %s240 = scalar_select %p239, %s26, 0
          %s241 = scalar_lea.vmem %s4, %s240
        $region32: #{tpu_custom_call.1} parent=11 // pred_fallthru
          _
      $region12: #{tpu_custom_call.1} parent=5 // pred_fallthru
        _
      %p242 = scmp.lt.s32.totalorder %s16, 2
      // Predicated region
      $region33: #{tpu_custom_call.1} parent=5 // pred_check
        %p243 = pneg %p242
      $region34: #{tpu_custom_call.1} parent=5 // pred_check_branch
        %245 = sbr.rel (%p243) target = $region36
      $region35: #{tpu_custom_call.1} parent=5 // pred_region
        _
      $region36: #{tpu_custom_call.1} parent=5 // pred_fallthru
        _
      %p246 = scmp.le.s32.totalorder 1, %s16
      %p247 = scmp.lt.s32.totalorder %s16, 3
      %p248 = pnand %p246, %p247
      %p249 = pneg %p248
      // Predicated region
      $region37: #{tpu_custom_call.1} parent=5 // pred_check
        _
      $region38: #{tpu_custom_call.1} parent=5 // pred_check_branch
        %251 = sbr.rel (%p248) target = $region40
      $region39: #{tpu_custom_call.1} parent=5 // pred_region
        %s252 = ssub.s32 %s16, 1
        // Predicated region
        $region41: #{tpu_custom_call.1} parent=39 // pred_check
          %p253 = pneg %p54
        $region42: #{tpu_custom_call.1} parent=39 // pred_check_branch
          %255 = sbr.rel (%p253) target = $region44
        $region43: #{tpu_custom_call.1} parent=39 // pred_region
          %257 = dma.done [#allocation4], 128
        $region44: #{tpu_custom_call.1} parent=39 // pred_fallthru
          _
        // Predicated region
        $region45: #{tpu_custom_call.1} parent=39 // pred_check
          %p258 = pneg %p75
        $region46: #{tpu_custom_call.1} parent=39 // pred_check_branch
          %260 = sbr.rel (%p258) target = $region48
        $region47: #{tpu_custom_call.1} parent=39 // pred_region
          %262 = dma.done [#allocation7], 16
        $region48: #{tpu_custom_call.1} parent=39 // pred_fallthru
          _
        // Predicated region
        $region49: #{tpu_custom_call.1} parent=39 // pred_check
          %p263 = pneg %p122
        $region50: #{tpu_custom_call.1} parent=39 // pred_check_branch
          %265 = sbr.rel (%p263) target = $region52
        $region51: #{tpu_custom_call.1} parent=39 // pred_region
          %267 = dma.done [#allocation7], 512
        $region52: #{tpu_custom_call.1} parent=39 // pred_fallthru
          _
        %p268 = pneg %p54
        %p269 = pneg %p51
        %p270 = pneg %p75
        %p271 = pneg %p72
        %p272 = pneg %p96
        %p273 = pneg %p93
        %p274 = pneg %p122
        %p275 = pneg %p119
        %p276 = scmp.lt.s32.totalorder %s26, 0
        %s277 = scalar_select %p276, %s26, 0
        %s278 = scalar_lea.vmem %s4, %s277
        %p279 = pneg %p148
        %p280 = pneg %p145
        %p281 = pneg %p176
        %p282 = pneg %p173
        %s283 = sand.u32 %s163, 1
        %s284 = scalar_lea.sflag [#allocation5], %s283
        %s285 = sand.u32 %s163, 1
        %s286 = smul.addr %s285, 8
        %s287 = scalar_lea.vmem [#allocation9], %s286
        %p288 = scmp.lt.s32.totalorder %s26, 0
        %s289 = scalar_select %p288, %s26, 0
        %s290 = scalar_lea.vmem %s4, %s289
        %p291 = scmp.eq.s32.totalorder %s26, 0
        // Predicated region
        $region53: #{tpu_custom_call.1} parent=39 // pred_check
          %p292 = pneg %p291
        $region54: #{tpu_custom_call.1} parent=39 // pred_check_branch
          %294 = sbr.rel (%p292) target = $region56
        $region55: #{tpu_custom_call.1} parent=39 // pred_region
          %v295 = vld [vmem:[#allocation3] sm:$0xff]
          %vm296 = vcmask 261120
          %v297 = vsel %vm296, %v295, 0.0
          %298 = vadd.xlane.f32.xlu0 %v297
          %v299 = vpop.xlane.xlu0 %298
          %v300 = vmul.f32 %v299, 0.03125
          %v301 = vmul.f32 %v295, %v295
          %v302 = vsel %vm296, %v301, 0.0
          %303 = vadd.xlane.f32.xlu0 %v302
          %v304 = vpop.xlane.xlu0 %303
          %v305 = vmul.f32 %v304, 0.03125
          %v306 = vmul.f32 %v300, %v300
          %v307 = vsub.f32 %v305, %v306
          %v308 = vmax.f32 %v307, 0.0
          %v309 = vadd.f32 %v308, 1e-05
          %v310 = vrsqrt.pop %v309
          %v311 = vmul.f32 %v310, %v309
          %v312 = vmul.f32 %v311, %v310
          %v313 = vmul.f32 0.5, %v312
          %v314 = vsub.f32 1.5, %v313
          %v315 = vmul.f32 %v310, %v314
          %vm316 = vweird.f32 %v309
          %vm317 = vweird.f32 %v310
          %vm318 = vmor %vm316, %vm317
          %v319 = vsel %vm318, %v310, %v315
          %v320 = vsub.f32 %v295, %v300
          %v321 = vmul.f32 %v320, %v319
          %v322 = vld [vmem:[#allocation6] sm:$0x1]
          %v324 = vperm.slane %v322, 0
          %v326 = vmul.f32 %v321, %v324
          %v327 = vld [vmem:[%s2] sm:$0x1]
          %v329 = vperm.slane %v327, 0
          %v331 = vadd.f32 %v326, %v329
          %332 = vst.msk [vmem:[#allocation2] sm:$0xff] %vm296, %v331
        $region56: #{tpu_custom_call.1} parent=39 // pred_fallthru
          _
        %v333 = vld [vmem:[#allocation2] sm:$0xff]
        %v334 = vld [vmem:[#allocation8] sm:$0xff]
        %v335 = vld [vmem:[#allocation8 + $0x8] sm:$0xff]
        %v336 = vld [vmem:[#allocation8 + $0x10] sm:$0xff]
        %v337 = vld [vmem:[#allocation8 + $0x18] sm:$0xff]
        %v338 = vld [vmem:[%s290] sm:$0x1]
        %v340 = vperm.slane %v338, 0
        %vm342 = vcmask 261120
        %v344 = vsel %vm342, %v333, 0
        %346 = vmatpush.msra.mxu0 0.0
        %347 = vmatpush.msra.mxu0 0.0
        %348 = vmatpush.msra.mxu0 0.0
        %349 = vmatpush.msra.mxu0 0.0
        %350 = vmatpush.msra.mxu0 0.0
        %351 = vmatpush.msra.mxu0 0.0
        %352 = vmatpush.msra.mxu0 0.0
        %353 = vmatpush.msra.mxu0 0.0
        %354 = vmatpush.msra.mxu0 0.0
        %355 = vmatpush.msra.mxu0 0.0
        %356 = vmatpush.msra.mxu0 0.0
        %357 = vmatpush.msra.mxu0 0.0
        %358 = vmatpush.msra.mxu0 %v337
        %359 = vmatpush.msra.mxu0 %v336
        %360 = vmatpush.msra.mxu0 %v335
        %361 = vmatpush.msra.mxu0 %v334
        %362 = vmatmul.f32.gmra.mxu0 %v344
        %v363 = vpop.f32.mrf.mxu0
        %v364 = vadd.f32 %v340, %v363
        %365 = vdwg.mxu0
        %366 = vst [vmem:[%s287] sm:$0xff] %v364
        %s367 = sand.u32 %s163, 1
        %s368 = scalar_lea.sflag [#allocation5], %s367
        %s369 = sand.u32 %s163, 1
        %s370 = smul.addr %s369, 8
        %s371 = scalar_lea.vmem [#allocation9], %s370
        // Predicated region
        $region57: #{tpu_custom_call.1} parent=39 // pred_check
          %p372 = pneg %p173
        $region58: #{tpu_custom_call.1} parent=39 // pred_check_branch
          %374 = sbr.rel (%p372) target = $region60
        $region59: #{tpu_custom_call.1} parent=39 // pred_region
          %376 = vsyncadd %s368, 0
          %s377 = sadd.s32 %s26, %s25
          %s378 = smul.addr %s377, 8
          %s379 = scalar_lea.hbm %s5, %s378
          %s381 = sshll.u32 %s371, 4
          %s382 = int_to_ptr.vmem [resolvable:$true] %s381
          %s383 = sshll.u32 %s379, 4
          %s384 = int_to_ptr.hbm [resolvable:$true] %s383
          %386 = dma.vmem_to_hbm [thread:$0]  %s382, 128, %s384, %s368
        $region60: #{tpu_custom_call.1} parent=39 // pred_fallthru
          _
      $region40: #{tpu_custom_call.1} parent=5 // pred_fallthru
        _
      %p387 = scmp.le.s32.totalorder 2, %s16
      // Predicated region
      $region61: #{tpu_custom_call.1} parent=5 // pred_check
        %p388 = pneg %p387
      $region62: #{tpu_custom_call.1} parent=5 // pred_check_branch
        %390 = sbr.rel (%p388) target = $region64
      $region63: #{tpu_custom_call.1} parent=5 // pred_region
        %s391 = ssub.s32 %s16, 2
        // Predicated region
        $region65: #{tpu_custom_call.1} parent=63 // pred_check
          %p392 = pneg %p179
        $region66: #{tpu_custom_call.1} parent=63 // pred_check_branch
          %394 = sbr.rel (%p392) target = $region68
        $region67: #{tpu_custom_call.1} parent=63 // pred_region
          %s395 = sand.u32 %s164, 1
          %s396 = scalar_lea.sflag [#allocation5], %s395
          %s397 = sand.u32 %s164, 1
          %s398 = smul.addr %s397, 8
          %s399 = scalar_lea.vmem [#allocation9], %s398
          %401 = dma.done %s396, 128
        $region68: #{tpu_custom_call.1} parent=63 // pred_fallthru
          _
      $region64: #{tpu_custom_call.1} parent=5 // pred_fallthru
        _
    $region6: #{tpu_custom_call.1} parent=1 // loop_footer
      %s20 = sadd.s32 1, %s16
    $region7: #{tpu_custom_call.1} parent=1 // loop_footer_branch
      %15 = sbr.rel target = $region3
    $region8: #{tpu_custom_call.1} parent=1 // loop_exit
      _
    %402 = vsyncpa [#allocation4], 1
    %s403 = scalar_lea.sflag [#allocation4], 1
    %404 = vsyncpa %s403, 1
    %405 = vsyncpa [#allocation7], 1
    %406 = vsyncpa [#allocation5], 1
    %s407 = scalar_lea.sflag [#allocation5], 1
    %408 = vsyncpa %s407, 1

// kernel: tpu_custom_call.1
$region0: #{tpu_custom_call.1}
  #allocation0 [shape = 'u32[]', space=smem, size = 0x4, offset = 0x4, fixed_abs, tag = 'smem constant byte address 0x4 - core index']
  #allocation1 [shape = 'u32[72,128]{1,0:T(1,128)}', space=vmem, size = 0x9000, scoped, tag = 'internal scratch']
  #allocation2 [shape = 'f32[8,32]{1,0:T(8,128)}', space=vmem, size = 0x1000, scoped, tag = 'scratch operand']
  %s0 = inlined_call_operand.hbm [shape: f32[16,32], index: 0, kind: input, shape index: {}]
  %s1 = inlined_call_operand.hbm [shape: f32[1,32], index: 1, kind: input, shape index: {}]
  %s2 = inlined_call_operand.vmem [shape: f32[1,32], index: 2, kind: input, shape index: {}]
  %s3 = inlined_call_operand.hbm [shape: f32[32,128], index: 3, kind: input, shape index: {}]
  %s4 = inlined_call_operand.vmem [shape: f32[1,128], index: 4, kind: input, shape index: {}]
  %s5 = inlined_call_operand.hbm [shape: f32[16,128], index: 5, kind: output, shape index: {}]
  %s6 = sld [smem:[#allocation0]]
  $region69: #{tpu_custom_call.1} parent=0
    _
  %s8 = ssub.s32 1, %s6
  %s9 = scalar_select 0, %s8, %s6
  $region1: #{tpu_custom_call.1} parent=0
    #allocation3 [shape = 'u8[8192]{0}', space=vmem, size = 0x2000, scoped, tag = 'input window, operand 0']
    #allocation4 [shape = 's32[2]{0}', space=sflag, size = 0x8, scoped, tag = 'scoped memory for tpu_custom_call.1']
    #allocation5 [shape = 's32[2]{0}', space=sflag, size = 0x8, scoped, tag = 'scoped memory for tpu_custom_call.1']
    #allocation6 [shape = 'u8[512]{0}', space=vmem, size = 0x400, scoped, tag = 'input window, operand 1, single buffered']
    #allocation7 [shape = 's32[1]{0}', space=sflag, size = 0x4, scoped, tag = 'scoped memory for tpu_custom_call.1']
    #allocation8 [shape = 'u8[16384]{0}', space=vmem, size = 0x4000, scoped, tag = 'input window, operand 3, single buffered']
    #allocation9 [shape = 'u8[8192]{0}', space=vmem, size = 0x2000, scoped, tag = 'output window, operand 0']
    %10 = vsyncpa [#allocation4], 0
    %s11 = scalar_lea.sflag [#allocation4], 1
    %12 = vsyncpa %s11, 0
    %13 = vsyncpa [#allocation7], 0
    %14 = vsyncpa [#allocation5], 0
    %s15 = scalar_lea.sflag [#allocation5], 1
    %16 = vsyncpa %s15, 0
    loop: start=0, step=1, limit=4
    $region2: #{tpu_custom_call.1} parent=1 // loop_pre_header
      _
    $region3: #{tpu_custom_call.1} parent=1 // loop_header
      %s18 = sphi 0, %s22
      %p19 = scmp.ge.s32.totalorder %s18, 4
      %s25 = sphi 0, %s37
      %s26 = sphi 0, %s33
      %s27 = sphi 0, %s25
      %s28 = sphi 0, %s26
      %s29 = sphi 0, %s27
      %s30 = sphi 0, %s28
      %s40 = sphi 0, %s42
      %s43 = sphi 0, %s40
      %s44 = sphi 0, %s43
      %s60 = sphi 0, %s44
      %s64 = sphi 0, %s64
      %s66 = sphi 0, %s64
      %s67 = sphi 0, %s66
      %s81 = sphi 0, %s67
      %s85 = sphi 0, %s85
      %s87 = sphi 0, %s85
      %s88 = sphi 0, %s87
      %s102 = sphi 0, %s88
      %s108 = sphi 0, %s110
      %s111 = sphi 0, %s108
      %s112 = sphi 0, %s111
      %s128 = sphi 0, %s112
      %s134 = sphi 0, %s136
      %s137 = sphi 0, %s134
      %s138 = sphi 0, %s137
      %s154 = sphi 0, %s138
      %s162 = sphi 0, %s164
      %s165 = sphi 0, %s162
      %s166 = sphi 0, %s165
      %s182 = sphi 0, %s166
    $region4: #{tpu_custom_call.1} parent=1 // loop_header_branch
      %21 = sbr.rel (%p19) target = $region8
    $region5: #{tpu_custom_call.1} parent=1 // loop_body
      %s23 = ssub.s32 %s18, 1
      %s24 = ssub.s32 %s18, 2
      %s31 = sadd.s32 1, %s26
      %p32 = scmp.ge.s32.totalorder %s31, 1
      %s33 = scalar_select %p32, 0, %s31
      %s34 = sadd.s32 1, %s25
      %s35 = scalar_select %p32, %s34, %s25
      %p36 = scmp.ge.s32.totalorder %s35, 2
      %s37 = scalar_select %p36, 0, %s35
      %s38 = ssub.s32 %s25, %s37
      %p39 = scmp.eq.s32.totalorder %s38, 0
      %s41 = sadd.s32 %s40, 1
      %s42 = scalar_select %p39, %s40, %s41
      %p45 = pneg %p39
      %p46 = scmp.eq.s32.totalorder %s18, 1
      %p47 = por %p45, %p46
      %p48 = scmp.ne.s32.totalorder %s40, %s43
      %p49 = scmp.eq.s32.totalorder %s18, 0
      %p50 = por %p48, %p49
      %p51 = scmp.ne.s32.totalorder %s40, %s43
      %p52 = scmp.eq.s32.totalorder %s23, 1
      %p53 = por %p51, %p52
      %p54 = scmp.ne.s32.totalorder %s43, %s44
      %p55 = scmp.eq.s32.totalorder %s23, 0
      %p56 = por %p54, %p55
      %p57 = scmp.ne.s32.totalorder %s43, %s44
      %p58 = scmp.eq.s32.totalorder %s24, 1
      %p59 = por %p57, %p58
      %p61 = scmp.ne.s32.totalorder %s44, %s60
      %p62 = scmp.eq.s32.totalorder %s24, 0
      %p63 = por %p61, %p62
      %s65 = sadd.s32 %s64, 1
      %p68 = scmp.eq.s32.totalorder %s18, 1
      %p69 = scmp.ne.s32.totalorder %s64, %s66
      %p70 = scmp.eq.s32.totalorder %s18, 0
      %p71 = por %p69, %p70
      %p72 = scmp.ne.s32.totalorder %s64, %s66
      %p73 = scmp.eq.s32.totalorder %s23, 1
      %p74 = por %p72, %p73
      %p75 = scmp.ne.s32.totalorder %s66, %s67
      %p76 = scmp.eq.s32.totalorder %s23, 0
      %p77 = por %p75, %p76
      %p78 = scmp.ne.s32.totalorder %s66, %s67
      %p79 = scmp.eq.s32.totalorder %s24, 1
      %p80 = por %p78, %p79
      %p82 = scmp.ne.s32.totalorder %s67, %s81
      %p83 = scmp.eq.s32.totalorder %s24, 0
      %p84 = por %p82, %p83
      %s86 = sadd.s32 %s85, 1
      %p89 = scmp.eq.s32.totalorder %s18, 1
      %p90 = scmp.ne.s32.totalorder %s85, %s87
      %p91 = scmp.eq.s32.totalorder %s18, 0
      %p92 = por %p90, %p91
      %p93 = scmp.ne.s32.totalorder %s85, %s87
      %p94 = scmp.eq.s32.totalorder %s23, 1
      %p95 = por %p93, %p94
      %p96 = scmp.ne.s32.totalorder %s87, %s88
      %p97 = scmp.eq.s32.totalorder %s23, 0
      %p98 = por %p96, %p97
      %p99 = scmp.ne.s32.totalorder %s87, %s88
      %p100 = scmp.eq.s32.totalorder %s24, 1
      %p101 = por %p99, %p100
      %p103 = scmp.ne.s32.totalorder %s88, %s102
      %p104 = scmp.eq.s32.totalorder %s24, 0
      %p105 = por %p103, %p104
      %s106 = ssub.s32 %s26, %s33
      %p107 = scmp.eq.s32.totalorder %s106, 0
      %s109 = sadd.s32 %s108, 1
      %s110 = scalar_select %p107, %s108, %s109
      %p113 = pneg %p107
      %p114 = scmp.eq.s32.totalorder %s18, 1
      %p115 = por %p113, %p114
      %p116 = scmp.ne.s32.totalorder %s108, %s111
      %p117 = scmp.eq.s32.totalorder %s18, 0
      %p118 = por %p116, %p117
      %p119 = scmp.ne.s32.totalorder %s108, %s111
      %p120 = scmp.eq.s32.totalorder %s23, 1
      %p121 = por %p119, %p120
      %p122 = scmp.ne.s32.totalorder %s111, %s112
      %p123 = scmp.eq.s32.totalorder %s23, 0
      %p124 = por %p122, %p123
      %p125 = scmp.ne.s32.totalorder %s111, %s112
      %p126 = scmp.eq.s32.totalorder %s24, 1
      %p127 = por %p125, %p126
      %p129 = scmp.ne.s32.totalorder %s112, %s128
      %p130 = scmp.eq.s32.totalorder %s24, 0
      %p131 = por %p129, %p130
      %s132 = ssub.s32 %s26, %s33
      %p133 = scmp.eq.s32.totalorder %s132, 0
      %s135 = sadd.s32 %s134, 1
      %s136 = scalar_select %p133, %s134, %s135
      %p139 = pneg %p133
      %p140 = scmp.eq.s32.totalorder %s18, 1
      %p141 = por %p139, %p140
      %p142 = scmp.ne.s32.totalorder %s134, %s137
      %p143 = scmp.eq.s32.totalorder %s18, 0
      %p144 = por %p142, %p143
      %p145 = scmp.ne.s32.totalorder %s134, %s137
      %p146 = scmp.eq.s32.totalorder %s23, 1
      %p147 = por %p145, %p146
      %p148 = scmp.ne.s32.totalorder %s137, %s138
      %p149 = scmp.eq.s32.totalorder %s23, 0
      %p150 = por %p148, %p149
      %p151 = scmp.ne.s32.totalorder %s137, %s138
      %p152 = scmp.eq.s32.totalorder %s24, 1
      %p153 = por %p151, %p152
      %p155 = scmp.ne.s32.totalorder %s138, %s154
      %p156 = scmp.eq.s32.totalorder %s24, 0
      %p157 = por %p155, %p156
      %s158 = ssub.s32 %s25, %s37
      %s159 = ssub.s32 %s26, %s33
      %s160 = sor.u32 %s158, %s159
      %p161 = scmp.eq.s32.totalorder %s160, 0
      %s163 = sadd.s32 %s162, 1
      %s164 = scalar_select %p161, %s162, %s163
      %p167 = pneg %p161
      %p168 = scmp.eq.s32.totalorder %s18, 1
      %p169 = por %p167, %p168
      %p170 = scmp.ne.s32.totalorder %s162, %s165
      %p171 = scmp.eq.s32.totalorder %s18, 0
      %p172 = por %p170, %p171
      %p173 = scmp.ne.s32.totalorder %s162, %s165
      %p174 = scmp.eq.s32.totalorder %s23, 1
      %p175 = por %p173, %p174
      %p176 = scmp.ne.s32.totalorder %s165, %s166
      %p177 = scmp.eq.s32.totalorder %s23, 0
      %p178 = por %p176, %p177
      %p179 = scmp.ne.s32.totalorder %s165, %s166
      %p180 = scmp.eq.s32.totalorder %s24, 1
      %p181 = por %p179, %p180
      %p183 = scmp.ne.s32.totalorder %s166, %s182
      %p184 = scmp.eq.s32.totalorder %s24, 0
      %p185 = por %p183, %p184
      %p186 = scmp.le.s32.totalorder 1, %s18
      %p187 = scmp.lt.s32.totalorder %s18, 3
      %p188 = pnand %p186, %p187
      %p189 = pneg %p188
      // Predicated region
      $region9: #{tpu_custom_call.1} parent=5 // pred_check
        _
      $region10: #{tpu_custom_call.1} parent=5 // pred_check_branch
        %191 = sbr.rel (%p188) target = $region12
      $region11: #{tpu_custom_call.1} parent=5 // pred_region
        %s192 = ssub.s32 %s18, 1
        // Predicated region
        $region13: #{tpu_custom_call.1} parent=11 // pred_check
          %p193 = pneg %p77
        $region14: #{tpu_custom_call.1} parent=11 // pred_check_branch
          %195 = sbr.rel (%p193) target = $region16
        $region15: #{tpu_custom_call.1} parent=11 // pred_region
          %197 = vsyncadd [#allocation7], 0
          %s199 = sshll.u32 %s1, 4
          %s200 = int_to_ptr.hbm [resolvable:$true] %s199
          %s201 = sshll.u32 [#allocation6], 4
          %s202 = int_to_ptr.vmem [resolvable:$true] %s201
          %204 = dma.hbm_to_vmem [thread:$0]  %s200, 16, %s202, [#allocation7]
        $region16: #{tpu_custom_call.1} parent=11 // pred_fallthru
          _
        // Predicated region
        $region17: #{tpu_custom_call.1} parent=11 // pred_check
          %p205 = pneg %p98
        $region18: #{tpu_custom_call.1} parent=11 // pred_check_branch
          %207 = sbr.rel (%p205) target = $region20
        $region19: #{tpu_custom_call.1} parent=11 // pred_region
          _
        $region20: #{tpu_custom_call.1} parent=11 // pred_fallthru
          _
        // Predicated region
        $region21: #{tpu_custom_call.1} parent=11 // pred_check
          %p208 = pneg %p124
        $region22: #{tpu_custom_call.1} parent=11 // pred_check_branch
          %210 = sbr.rel (%p208) target = $region24
        $region23: #{tpu_custom_call.1} parent=11 // pred_region
          %212 = vsyncadd [#allocation7], 0
          %s213 = smul.addr %s28, 8
          %s214 = scalar_lea.hbm %s3, %s213
          %s215 = sshll.u32 %s214, 4
          %s216 = int_to_ptr.hbm [resolvable:$true] %s215
          %s217 = sshll.u32 [#allocation8], 4
          %s218 = int_to_ptr.vmem [resolvable:$true] %s217
          %223 = dma.hbm_to_vmem [thread:$0]  %s216, 512, %s218, [#allocation7], 128, 128, 8
        $region24: #{tpu_custom_call.1} parent=11 // pred_fallthru
          _
        // Predicated region
        $region25: #{tpu_custom_call.1} parent=11 // pred_check
          %p224 = pneg %p150
        $region26: #{tpu_custom_call.1} parent=11 // pred_check_branch
          %226 = sbr.rel (%p224) target = $region28
        $region27: #{tpu_custom_call.1} parent=11 // pred_region
          %p227 = scmp.lt.s32.totalorder %s28, 0
          %s228 = scalar_select %p227, %s28, 0
          %s229 = scalar_lea.vmem %s4, %s228
        $region28: #{tpu_custom_call.1} parent=11 // pred_fallthru
          _
      $region12: #{tpu_custom_call.1} parent=5 // pred_fallthru
        _
      %p230 = scmp.lt.s32.totalorder %s18, 2
      // Predicated region
      $region29: #{tpu_custom_call.1} parent=5 // pred_check
        %p231 = pneg %p230
      $region30: #{tpu_custom_call.1} parent=5 // pred_check_branch
        %233 = sbr.rel (%p231) target = $region32
      $region31: #{tpu_custom_call.1} parent=5 // pred_region
        // Predicated region
        $region33: #{tpu_custom_call.1} parent=31 // pred_check
          %p234 = pneg %p50
        $region34: #{tpu_custom_call.1} parent=31 // pred_check_branch
          %236 = sbr.rel (%p234) target = $region36
        $region35: #{tpu_custom_call.1} parent=31 // pred_region
          %s237 = sand.u32 %s40, 1
          %s238 = scalar_lea.sflag [#allocation4], %s237
          %s239 = sand.u32 %s40, 1
          %s240 = smul.addr %s239, 8
          %s241 = scalar_lea.vmem [#allocation3], %s240
          %243 = vsyncadd %s238, 0
          %s244 = smul.addr %s25, 8
          %s245 = scalar_lea.hbm %s0, %s244
          %s247 = sshll.u32 %s245, 4
          %s248 = int_to_ptr.hbm [resolvable:$true] %s247
          %s249 = sshll.u32 %s241, 4
          %s250 = int_to_ptr.vmem [resolvable:$true] %s249
          %252 = dma.hbm_to_vmem [thread:$0]  %s248, 128, %s250, %s238
        $region36: #{tpu_custom_call.1} parent=31 // pred_fallthru
          _
      $region32: #{tpu_custom_call.1} parent=5 // pred_fallthru
        _
      %p253 = scmp.le.s32.totalorder 1, %s18
      %p254 = scmp.lt.s32.totalorder %s18, 3
      %p255 = pnand %p253, %p254
      %p256 = pneg %p255
      // Predicated region
      $region37: #{tpu_custom_call.1} parent=5 // pred_check
        _
      $region38: #{tpu_custom_call.1} parent=5 // pred_check_branch
        %258 = sbr.rel (%p255) target = $region40
      $region39: #{tpu_custom_call.1} parent=5 // pred_region
        %s259 = ssub.s32 %s18, 1
        %s260 = sand.u32 %s43, 1
        %s261 = scalar_lea.sflag [#allocation4], %s260
        %s262 = sand.u32 %s43, 1
        %s263 = smul.addr %s262, 8
        %s264 = scalar_lea.vmem [#allocation3], %s263
        // Predicated region
        $region41: #{tpu_custom_call.1} parent=39 // pred_check
          %p265 = pneg %p56
        $region42: #{tpu_custom_call.1} parent=39 // pred_check_branch
          %267 = sbr.rel (%p265) target = $region44
        $region43: #{tpu_custom_call.1} parent=39 // pred_region
          %269 = dma.done %s261, 128
        $region44: #{tpu_custom_call.1} parent=39 // pred_fallthru
          _
        // Predicated region
        $region45: #{tpu_custom_call.1} parent=39 // pred_check
          %p270 = pneg %p77
        $region46: #{tpu_custom_call.1} parent=39 // pred_check_branch
          %272 = sbr.rel (%p270) target = $region48
        $region47: #{tpu_custom_call.1} parent=39 // pred_region
          %274 = dma.done [#allocation7], 16
        $region48: #{tpu_custom_call.1} parent=39 // pred_fallthru
          _
        // Predicated region
        $region49: #{tpu_custom_call.1} parent=39 // pred_check
          %p275 = pneg %p124
        $region50: #{tpu_custom_call.1} parent=39 // pred_check_branch
          %277 = sbr.rel (%p275) target = $region52
        $region51: #{tpu_custom_call.1} parent=39 // pred_region
          %279 = dma.done [#allocation7], 512
        $region52: #{tpu_custom_call.1} parent=39 // pred_fallthru
          _
        %s280 = sand.u32 %s43, 1
        %s281 = scalar_lea.sflag [#allocation4], %s280
        %s282 = sand.u32 %s43, 1
        %s283 = smul.addr %s282, 8
        %s284 = scalar_lea.vmem [#allocation3], %s283
        %p285 = pneg %p56
        %p286 = pneg %p53
        %p287 = pneg %p77
        %p288 = pneg %p74
        %p289 = pneg %p98
        %p290 = pneg %p95
        %p291 = pneg %p124
        %p292 = pneg %p121
        %p293 = scmp.lt.s32.totalorder %s28, 0
        %s294 = scalar_select %p293, %s28, 0
        %s295 = scalar_lea.vmem %s4, %s294
        %p296 = pneg %p150
        %p297 = pneg %p147
        %p298 = pneg %p178
        %p299 = pneg %p175
        %s300 = sand.u32 %s165, 1
        %s301 = scalar_lea.sflag [#allocation5], %s300
        %s302 = sand.u32 %s165, 1
        %s303 = smul.addr %s302, 8
        %s304 = scalar_lea.vmem [#allocation9], %s303
        %p305 = scmp.lt.s32.totalorder %s28, 0
        %s306 = scalar_select %p305, %s28, 0
        %s307 = scalar_lea.vmem %s4, %s306
        %p308 = scmp.eq.s32.totalorder %s28, 0
        // Predicated region
        $region53: #{tpu_custom_call.1} parent=39 // pred_check
          %p309 = pneg %p308
        $region54: #{tpu_custom_call.1} parent=39 // pred_check_branch
          %311 = sbr.rel (%p309) target = $region56
        $region55: #{tpu_custom_call.1} parent=39 // pred_region
          %v312 = vld [vmem:[%s264] sm:$0xff]
          %vm313 = vcmask 261120
          %v314 = vsel %vm313, %v312, 0.0
          %315 = vadd.xlane.f32.xlu0 %v314
          %v316 = vpop.xlane.xlu0 %315
          %v317 = vmul.f32 %v316, 0.03125
          %v318 = vmul.f32 %v312, %v312
          %v319 = vsel %vm313, %v318, 0.0
          %320 = vadd.xlane.f32.xlu0 %v319
          %v321 = vpop.xlane.xlu0 %320
          %v322 = vmul.f32 %v321, 0.03125
          %v323 = vmul.f32 %v317, %v317
          %v324 = vsub.f32 %v322, %v323
          %v325 = vmax.f32 %v324, 0.0
          %v326 = vadd.f32 %v325, 1e-05
          %v327 = vrsqrt.pop %v326
          %v328 = vmul.f32 %v327, %v326
          %v329 = vmul.f32 %v328, %v327
          %v330 = vmul.f32 0.5, %v329
          %v331 = vsub.f32 1.5, %v330
          %v332 = vmul.f32 %v327, %v331
          %vm333 = vweird.f32 %v326
          %vm334 = vweird.f32 %v327
          %vm335 = vmor %vm333, %vm334
          %v336 = vsel %vm335, %v327, %v332
          %v337 = vsub.f32 %v312, %v317
          %v338 = vmul.f32 %v337, %v336
          %v339 = vld [vmem:[#allocation6] sm:$0x1]
          %v341 = vperm.slane %v339, 0
          %v343 = vmul.f32 %v338, %v341
          %v344 = vld [vmem:[%s2] sm:$0x1]
          %v346 = vperm.slane %v344, 0
          %v348 = vadd.f32 %v343, %v346
          %349 = vst.msk [vmem:[#allocation2] sm:$0xff] %vm313, %v348
        $region56: #{tpu_custom_call.1} parent=39 // pred_fallthru
          _
        %v350 = vld [vmem:[#allocation2] sm:$0xff]
        %v351 = vld [vmem:[#allocation8] sm:$0xff]
        %v352 = vld [vmem:[#allocation8 + $0x8] sm:$0xff]
        %v353 = vld [vmem:[#allocation8 + $0x10] sm:$0xff]
        %v354 = vld [vmem:[#allocation8 + $0x18] sm:$0xff]
        %v355 = vld [vmem:[%s307] sm:$0x1]
        %v357 = vperm.slane %v355, 0
        %vm359 = vcmask 261120
        %v361 = vsel %vm359, %v350, 0
        %363 = vmatpush.msra.mxu0 0.0
        %364 = vmatpush.msra.mxu0 0.0
        %365 = vmatpush.msra.mxu0 0.0
        %366 = vmatpush.msra.mxu0 0.0
        %367 = vmatpush.msra.mxu0 0.0
        %368 = vmatpush.msra.mxu0 0.0
        %369 = vmatpush.msra.mxu0 0.0
        %370 = vmatpush.msra.mxu0 0.0
        %371 = vmatpush.msra.mxu0 0.0
        %372 = vmatpush.msra.mxu0 0.0
        %373 = vmatpush.msra.mxu0 0.0
        %374 = vmatpush.msra.mxu0 0.0
        %375 = vmatpush.msra.mxu0 %v354
        %376 = vmatpush.msra.mxu0 %v353
        %377 = vmatpush.msra.mxu0 %v352
        %378 = vmatpush.msra.mxu0 %v351
        %379 = vmatmul.f32.gmra.mxu0 %v361
        %v380 = vpop.f32.mrf.mxu0
        %v381 = vadd.f32 %v357, %v380
        %382 = vdwg.mxu0
        %383 = vst [vmem:[%s304] sm:$0xff] %v381
        %s384 = sand.u32 %s165, 1
        %s385 = scalar_lea.sflag [#allocation5], %s384
        %s386 = sand.u32 %s165, 1
        %s387 = smul.addr %s386, 8
        %s388 = scalar_lea.vmem [#allocation9], %s387
        // Predicated region
        $region57: #{tpu_custom_call.1} parent=39 // pred_check
          %p389 = pneg %p175
        $region58: #{tpu_custom_call.1} parent=39 // pred_check_branch
          %391 = sbr.rel (%p389) target = $region60
        $region59: #{tpu_custom_call.1} parent=39 // pred_region
          %393 = vsyncadd %s385, 0
          %s394 = sadd.s32 %s28, %s27
          %s395 = smul.addr %s394, 8
          %s396 = scalar_lea.hbm %s5, %s395
          %s398 = sshll.u32 %s388, 4
          %s399 = int_to_ptr.vmem [resolvable:$true] %s398
          %s400 = sshll.u32 %s396, 4
          %s401 = int_to_ptr.hbm [resolvable:$true] %s400
          %403 = dma.vmem_to_hbm [thread:$0]  %s399, 128, %s401, %s385
        $region60: #{tpu_custom_call.1} parent=39 // pred_fallthru
          _
      $region40: #{tpu_custom_call.1} parent=5 // pred_fallthru
        _
      %p404 = scmp.le.s32.totalorder 2, %s18
      // Predicated region
      $region61: #{tpu_custom_call.1} parent=5 // pred_check
        %p405 = pneg %p404
      $region62: #{tpu_custom_call.1} parent=5 // pred_check_branch
        %407 = sbr.rel (%p405) target = $region64
      $region63: #{tpu_custom_call.1} parent=5 // pred_region
        %s408 = ssub.s32 %s18, 2
        // Predicated region
        $region65: #{tpu_custom_call.1} parent=63 // pred_check
          %p409 = pneg %p181
        $region66: #{tpu_custom_call.1} parent=63 // pred_check_branch
          %411 = sbr.rel (%p409) target = $region68
        $region67: #{tpu_custom_call.1} parent=63 // pred_region
          %s412 = sand.u32 %s166, 1
          %s413 = scalar_lea.sflag [#allocation5], %s412
          %s414 = sand.u32 %s166, 1
          %s415 = smul.addr %s414, 8
          %s416 = scalar_lea.vmem [#allocation9], %s415
          %418 = dma.done %s413, 128
        $region68: #{tpu_custom_call.1} parent=63 // pred_fallthru
          _
      $region64: #{tpu_custom_call.1} parent=5 // pred_fallthru
        _
    $region6: #{tpu_custom_call.1} parent=1 // loop_footer
      %s22 = sadd.s32 1, %s18
    $region7: #{tpu_custom_call.1} parent=1 // loop_footer_branch
      %17 = sbr.rel target = $region3
    $region8: #{tpu_custom_call.1} parent=1 // loop_exit
      _
    %419 = vsyncpa [#allocation4], 1
    %s420 = scalar_lea.sflag [#allocation4], 1
    %421 = vsyncpa %s420, 1
    %422 = vsyncpa [#allocation7], 1
    %423 = vsyncpa [#allocation5], 1
    %s424 = scalar_lea.sflag [#allocation5], 1
    %425 = vsyncpa %s424, 1

</llo_original>
